<compile_context>
chip_gen: v7x
topology: tpu7x:2x2x1
jax: 0.10.0
libtpu: 0.0.40
codegen_flags: <defaults>
</compile_context>

<pallas_src>
import jax
import jax.numpy as jnp
import numpy as np
from jax import lax
from jax.experimental import pallas as pl
from jax.experimental.pallas import tpu as pltpu


def _round_up(n: int, m: int) -> int:
    return ((n + m - 1) // m) * m


def _cdiv(a: int, b: int) -> int:
    return -(-a // b)


def prediction_head_kernel(x_ref, w1_ref, b1_ref, w2_ref, b2_ref, w3_ref, b3_ref, o_ref):
    x = x_ref[...]                                        # (TILE_B, H) bf16

    # Layer 1 + residual #1 (skip added in f32 on the VPU; free while HBM-bound).
    h1 = (jnp.dot(x, w1_ref[...], preferred_element_type=jnp.float32)
          + b1_ref[...] + x.astype(jnp.float32))
    a1 = jnp.maximum(h1, 0.0).astype(jnp.bfloat16)        # ReLU; bf16 operand for next matmul

    # Layer 2 + residual #2 (skip = h1, saved before the ReLU, as in the torch loop).
    h2 = jnp.dot(a1, w2_ref[...], preferred_element_type=jnp.float32) + b2_ref[...] + h1
    a2 = jnp.maximum(h2, 0.0)                             # ReLU (f32)

    # Layer 3 (H -> 1), produced LANE-DENSE as a (1, TILE_B) row:
    #   w3_row (1, H) . a2 (TILE_B, H), contracting H  ==  (a2 @ W3.T).T
    h3 = lax.dot_general(
        w3_ref[...], a2,
        dimension_numbers=(((1,), (1,)), ((), ())),
        preferred_element_type=jnp.float32,
    ) + b3_ref[...]                                       # (1, TILE_B)

    o_ref[...] = h3.astype(o_ref.dtype)


def prediction_head(x, w1, b1, w2, b2, w3, b3, *, tile_b: int = 512):
    """x: (B, H). PyTorch-layout params: wK (out, in), bK (out,). Returns (B, 1) float32."""
    B, H = x.shape

    # ---- one-time parameter prep (layout + dtype glue, outside the kernel) ----
    w1t = w1.T.astype(jnp.bfloat16)                       # (H, H)
    w2t = w2.T.astype(jnp.bfloat16)                       # (H, H)
    w3_row = w3.reshape(1, H).astype(jnp.float32)         # lane-dense row for layer 3
    b1r = b1.reshape(1, H).astype(jnp.float32)
    b2r = b2.reshape(1, H).astype(jnp.float32)
    b3r = b3.reshape(1, 1).astype(jnp.float32)
    x_bf = x.astype(jnp.bfloat16)

    # ---- batch tiling ----
    # Lane-dense output needs tile_b % 128 == 0; keep >= 2 grid steps when B allows it so
    # both v7x TensorCores get work on the "parallel" batch axis.
    tile_b = max(128, _round_up(tile_b, 128))
    two_way = max(128, _round_up(_cdiv(B, 2), 128))
    tile_b = min(tile_b, two_way)

    num_tiles = _cdiv(B, tile_b)
    b_pad = num_tiles * tile_b
    if b_pad != B:
        x_bf = jnp.pad(x_bf, ((0, b_pad - B), (0, 0)))

    resident = lambda i: (0, 0)  # same block every grid step -> stays VMEM-resident

    out = pl.pallas_call(
        prediction_head_kernel,
        out_shape=jax.ShapeDtypeStruct((1, b_pad), jnp.float32),
        grid=(num_tiles,),
        in_specs=[
            pl.BlockSpec((tile_b, H), lambda i: (i, 0)),   # x tile, pipelined over batch
            pl.BlockSpec((H, H), resident),                # W1.T (bf16, weight-stationary)
            pl.BlockSpec((1, H), resident),                # b1 (f32)
            pl.BlockSpec((H, H), resident),                # W2.T (bf16, weight-stationary)
            pl.BlockSpec((1, H), resident),                # b2 (f32)
            pl.BlockSpec((1, H), resident),                # w3 row (f32)
            pl.BlockSpec((1, 1), resident),                # b3 (f32)
        ],
        out_specs=pl.BlockSpec((1, tile_b), lambda i: (0, i)),  # lane-dense (1, TILE_B) row
        compiler_params=pltpu.CompilerParams(
            dimension_semantics=("parallel",),             # batch axis: megacore-shardable
        ),
    )(x_bf, w1t, b1r, w2t, b2r, w3_row, b3r)

    out = out.reshape(b_pad, 1)
    return out[:B] if b_pad != B else out


def prediction_head_ref(x, w1, b1, w2, b2, w3, b3):
    """Pure-JAX f32 reference mirroring the PyTorch forward loop exactly."""
    input_x = x
    h = x @ w1.T + b1
    h = h + input_x
    input_x = h
    h = jnp.maximum(h, 0.0)
    h = h @ w2.T + b2
    h = h + input_x
    input_x = h
    h = jnp.maximum(h, 0.0)
    h = h @ w3.T + b3
    return h


def prediction_head_ref_bf16(x, w1, b1, w2, b2, w3, b3):
    """Reference with the same bf16-operand / f32-accumulate numerics as the kernel."""
    xb = x.astype(jnp.bfloat16)
    w1t = w1.T.astype(jnp.bfloat16)
    w2t = w2.T.astype(jnp.bfloat16)
    h1 = (jnp.dot(xb, w1t, preferred_element_type=jnp.float32)
          + b1.reshape(1, -1) + xb.astype(jnp.float32))
    a1 = jnp.maximum(h1, 0.0).astype(jnp.bfloat16)
    h2 = jnp.dot(a1, w2t, preferred_element_type=jnp.float32) + b2.reshape(1, -1) + h1
    a2 = jnp.maximum(h2, 0.0)
    return (jnp.sum(a2 * w3.reshape(1, -1).astype(jnp.float32), axis=-1, keepdims=True)
            + b3.reshape(1, -1))


if __name__ == "__main__":
    B, H = 256, 128  # small, but exercises a 2-step batch grid (2 x 128 rows) and full-lane H

    key = jax.random.PRNGKey(0)
    kx, k1, k2, k3, kb1, kb2, kb3 = jax.random.split(key, 7)

    x = jax.random.normal(kx, (B, H), dtype=jnp.float32)
    # PyTorch Linear layout: weight (out, in), bias (out,)
    w1 = jax.random.normal(k1, (H, H), dtype=jnp.float32) * 0.1
    b1 = jax.random.normal(kb1, (H,), dtype=jnp.float32) * 0.1
    w2 = jax.random.normal(k2, (H, H), dtype=jnp.float32) * 0.1
    b2 = jax.random.normal(kb2, (H,), dtype=jnp.float32) * 0.1
    w3 = jax.random.normal(k3, (1, H), dtype=jnp.float32) * 0.1
    b3 = jax.random.normal(kb3, (1,), dtype=jnp.float32) * 0.1

    out = prediction_head(x, w1, b1, w2, b2, w3, b3)
    out = jax.block_until_ready(out)
    assert out.shape == (B, 1)

    # Tight check vs. a reference with identical (bf16 operand, f32 accumulate) numerics.
    ref_bf16 = prediction_head_ref_bf16(x, w1, b1, w2, b2, w3, b3)
    np.testing.assert_allclose(np.asarray(out), np.asarray(ref_bf16), rtol=2e-3, atol=2e-3)

    # Loose check vs. the pure-f32 PyTorch-mirror reference (difference = bf16 quantization only).
    ref_f32 = prediction_head_ref(x, w1, b1, w2, b2, w3, b3)
    np.testing.assert_allclose(np.asarray(out), np.asarray(ref_f32), rtol=5e-2, atol=1e-1)

    print("KERNEL_OK")
</pallas_src>

<mosaic_0001>
module attributes {stable_mosaic.version = 11 : i64} {
  func.func @prediction_head_kernel(%arg0: i32, %arg1: memref<128x128xbf16, #tpu.memory_space<vmem>>, %arg2: memref<128x128xbf16, #tpu.memory_space<vmem>>, %arg3: memref<1x128xf32, #tpu.memory_space<vmem>>, %arg4: memref<128x128xbf16, #tpu.memory_space<vmem>>, %arg5: memref<1x128xf32, #tpu.memory_space<vmem>>, %arg6: memref<1x128xf32, #tpu.memory_space<vmem>>, %arg7: memref<1x1xf32, #tpu.memory_space<vmem>>, %arg8: memref<1x128xf32, #tpu.memory_space<vmem>>) attributes {dimension_semantics = [#tpu.dimension_semantics<parallel>], iteration_bounds = array<i64: 2>, scalar_prefetch = 0 : i64, scratch_operands = 0 : i64, tpu.core_type = #tpu.core_type<tc>, window_params = [{transform_indices = @transform_0, window_bounds = array<i64: 128, 128>}, {pipeline_mode = #tpu.pipeline_mode<synchronous>, transform_indices = @transform_1, window_bounds = array<i64: 128, 128>}, {pipeline_mode = #tpu.pipeline_mode<synchronous>, transform_indices = @transform_2, window_bounds = array<i64: 1, 128>}, {pipeline_mode = #tpu.pipeline_mode<synchronous>, transform_indices = @transform_3, window_bounds = array<i64: 128, 128>}, {pipeline_mode = #tpu.pipeline_mode<synchronous>, transform_indices = @transform_4, window_bounds = array<i64: 1, 128>}, {pipeline_mode = #tpu.pipeline_mode<synchronous>, transform_indices = @transform_5, window_bounds = array<i64: 1, 128>}, {pipeline_mode = #tpu.pipeline_mode<synchronous>, transform_indices = @transform_6, window_bounds = array<i64: 1, 1>}, {transform_indices = @transform_7, window_bounds = array<i64: 1, 128>}]} {
    %c0 = arith.constant 0 : index
    %c0_0 = arith.constant 0 : index
    %0 = vector.load %arg1[%c0, %c0_0] : memref<128x128xbf16, #tpu.memory_space<vmem>>, vector<128x128xbf16>
    %c0_1 = arith.constant 0 : index
    %c0_2 = arith.constant 0 : index
    %1 = vector.load %arg2[%c0_1, %c0_2] : memref<128x128xbf16, #tpu.memory_space<vmem>>, vector<128x128xbf16>
    %cst = arith.constant dense<0.000000e+00> : vector<128x128xf32>
    %2 = tpu.matmul %0, %1, %cst {dimension_numbers = #tpu.dot_dimension_numbers<[1], [0], [0], [1], [0, 0, 1, 1], [], []>} : vector<128x128xbf16>, vector<128x128xbf16>, vector<128x128xf32> -> vector<128x128xf32>
    %c0_3 = arith.constant 0 : index
    %c0_4 = arith.constant 0 : index
    %3 = vector.load %arg3[%c0_3, %c0_4] : memref<1x128xf32, #tpu.memory_space<vmem>>, vector<1x128xf32>
    %4 = vector.broadcast %3 : vector<1x128xf32> to vector<128x128xf32>
    %5 = arith.addf %2, %4 : vector<128x128xf32>
    %6 = arith.extf %0 : vector<128x128xbf16> to vector<128x128xf32>
    %7 = arith.addf %5, %6 : vector<128x128xf32>
    %cst_5 = arith.constant 0.000000e+00 : f32
    %8 = vector.broadcast %cst_5 : f32 to vector<128x128xf32>
    %9 = arith.maximumf %7, %8 : vector<128x128xf32>
    %10 = arith.truncf %9 : vector<128x128xf32> to vector<128x128xbf16>
    %c0_6 = arith.constant 0 : index
    %c0_7 = arith.constant 0 : index
    %11 = vector.load %arg4[%c0_6, %c0_7] : memref<128x128xbf16, #tpu.memory_space<vmem>>, vector<128x128xbf16>
    %cst_8 = arith.constant dense<0.000000e+00> : vector<128x128xf32>
    %12 = tpu.matmul %10, %11, %cst_8 {dimension_numbers = #tpu.dot_dimension_numbers<[1], [0], [0], [1], [0, 0, 1, 1], [], []>} : vector<128x128xbf16>, vector<128x128xbf16>, vector<128x128xf32> -> vector<128x128xf32>
    %c0_9 = arith.constant 0 : index
    %c0_10 = arith.constant 0 : index
    %13 = vector.load %arg5[%c0_9, %c0_10] : memref<1x128xf32, #tpu.memory_space<vmem>>, vector<1x128xf32>
    %14 = vector.broadcast %13 : vector<1x128xf32> to vector<128x128xf32>
    %15 = arith.addf %12, %14 : vector<128x128xf32>
    %16 = arith.addf %15, %7 : vector<128x128xf32>
    %cst_11 = arith.constant 0.000000e+00 : f32
    %17 = vector.broadcast %cst_11 : f32 to vector<128x128xf32>
    %18 = arith.maximumf %16, %17 : vector<128x128xf32>
    %c0_12 = arith.constant 0 : index
    %c0_13 = arith.constant 0 : index
    %19 = vector.load %arg6[%c0_12, %c0_13] : memref<1x128xf32, #tpu.memory_space<vmem>>, vector<1x128xf32>
    %cst_14 = arith.constant dense<0.000000e+00> : vector<1x128xf32>
    %20 = tpu.matmul %19, %18, %cst_14 {dimension_numbers = #tpu.dot_dimension_numbers<[1], [1], [0], [0], [0, 0, 1, 0], [], []>} : vector<1x128xf32>, vector<128x128xf32>, vector<1x128xf32> -> vector<1x128xf32>
    %c0_15 = arith.constant 0 : index
    %c0_16 = arith.constant 0 : index
    %21 = vector.load %arg7[%c0_15, %c0_16] : memref<1x1xf32, #tpu.memory_space<vmem>>, vector<1x1xf32>
    %22 = vector.broadcast %21 : vector<1x1xf32> to vector<1x128xf32>
    %23 = arith.addf %20, %22 : vector<1x128xf32>
    %c0_17 = arith.constant 0 : index
    %c0_18 = arith.constant 0 : index
    %24 = vector.load %arg8[%c0_17, %c0_18] : memref<1x128xf32, #tpu.memory_space<vmem>>, vector<1x128xf32>
    tpu.vector_store %arg8[%c0_17, %c0_18], %23 {strides = array<i32>} : memref<1x128xf32, #tpu.memory_space<vmem>>, vector<1x128xf32>,
    return
  }
  func.func @transform_0(%arg0: i32) -> (i32, i32) {
    %c0_i32 = arith.constant 0 : i32
    %c0_i32_0 = arith.constant 0 : i32
    return %arg0, %c0_i32 : i32, i32
  }
  func.func @transform_1(%arg0: i32) -> (i32, i32) {
    %c0_i32 = arith.constant 0 : i32
    %c0_i32_0 = arith.constant 0 : i32
    %c0_i32_1 = arith.constant 0 : i32
    return %c0_i32, %c0_i32_0 : i32, i32
  }
  func.func @transform_2(%arg0: i32) -> (i32, i32) {
    %c0_i32 = arith.constant 0 : i32
    %c0_i32_0 = arith.constant 0 : i32
    %c0_i32_1 = arith.constant 0 : i32
    return %c0_i32, %c0_i32_0 : i32, i32
  }
  func.func @transform_3(%arg0: i32) -> (i32, i32) {
    %c0_i32 = arith.constant 0 : i32
    %c0_i32_0 = arith.constant 0 : i32
    %c0_i32_1 = arith.constant 0 : i32
    return %c0_i32, %c0_i32_0 : i32, i32
  }
  func.func @transform_4(%arg0: i32) -> (i32, i32) {
    %c0_i32 = arith.constant 0 : i32
    %c0_i32_0 = arith.constant 0 : i32
    %c0_i32_1 = arith.constant 0 : i32
    return %c0_i32, %c0_i32_0 : i32, i32
  }
  func.func @transform_5(%arg0: i32) -> (i32, i32) {
    %c0_i32 = arith.constant 0 : i32
    %c0_i32_0 = arith.constant 0 : i32
    %c0_i32_1 = arith.constant 0 : i32
    return %c0_i32, %c0_i32_0 : i32, i32
  }
  func.func @transform_6(%arg0: i32) -> (i32, i32) {
    %c0_i32 = arith.constant 0 : i32
    %c0_i32_0 = arith.constant 0 : i32
    %c0_i32_1 = arith.constant 0 : i32
    return %c0_i32, %c0_i32_0 : i32, i32
  }
  func.func @transform_7(%arg0: i32) -> (i32, i32) {
    %c0_i32 = arith.constant 0 : i32
    %c0_i32_0 = arith.constant 0 : i32
    return %c0_i32, %arg0 : i32, i32
  }
}

</mosaic_0001>

<llo_original>
// kernel: tpu_custom_call.1
$region0: #{tpu_custom_call.1}
  #allocation0 [shape = 'u32[]', space=smem, size = 0x4, offset = 0x4, fixed_abs, tag = 'smem constant byte address 0x4 - core index']
  #allocation1 [shape = 'u32[144,128]{1,0:T(1,128)}', space=vmem, size = 0x12000, scoped, tag = 'internal scratch']
  #allocation2 [shape = 'f32[1,1]{1,0:T(1,128)S(1)}', space=vmem, size = 0x200, scoped, tag = 'scoped memory for tpu_custom_call.1']
  %s0 = inlined_call_operand.hbm [shape: bf16[256,128], index: 0, kind: input, shape index: {}]
  %s1 = inlined_call_operand.hbm [shape: bf16[128,128], index: 1, kind: input, shape index: {}]
  %s2 = inlined_call_operand.vmem [shape: f32[1,128], index: 2, kind: input, shape index: {}]
  %s3 = inlined_call_operand.hbm [shape: bf16[128,128], index: 3, kind: input, shape index: {}]
  %s4 = inlined_call_operand.vmem [shape: f32[1,128], index: 4, kind: input, shape index: {}]
  %s5 = inlined_call_operand.vmem [shape: f32[1,128], index: 5, kind: input, shape index: {}]
  %s6 = inlined_call_operand.<no memory space> [shape: f32[1,1], index: 6, kind: input, shape index: {}]
  %s7 = inlined_call_operand.hbm [shape: f32[1,256], index: 7, kind: output, shape index: {}]
  %s8 = sld [smem:[#allocation0]]
  $region73: #{tpu_custom_call.1} parent=0
    _
  %s10 = ssub.s32 1, %s8
  %s11 = scalar_select 0, %s10, %s8
  %v12 = vstv %s6
  %13 = vst [vmem:[#allocation2] sm:$0x1] %v12
  $region1: #{tpu_custom_call.1} parent=0
    #allocation3 [shape = 'u8[65536]{0}', space=vmem, size = 0x10000, scoped, tag = 'input window, operand 0']
    #allocation4 [shape = 's32[2]{0}', space=sflag, size = 0x8, scoped, tag = 'scoped memory for tpu_custom_call.1']
    #allocation5 [shape = 's32[2]{0}', space=sflag, size = 0x8, scoped, tag = 'scoped memory for tpu_custom_call.1']
    #allocation6 [shape = 'u8[32768]{0}', space=vmem, size = 0x8000, scoped, tag = 'input window, operand 1, single buffered']
    #allocation7 [shape = 's32[1]{0}', space=sflag, size = 0x4, scoped, tag = 'scoped memory for tpu_custom_call.1']
    #allocation8 [shape = 'u8[32768]{0}', space=vmem, size = 0x8000, scoped, tag = 'input window, operand 3, single buffered']
    #allocation9 [shape = 'u8[1024]{0}', space=vmem, size = 0x400, scoped, tag = 'output window, operand 0']
    %14 = vsyncpa [#allocation4], 0
    %s15 = scalar_lea.sflag [#allocation4], 1
    %16 = vsyncpa %s15, 0
    %17 = vsyncpa [#allocation7], 0
    %18 = vsyncpa [#allocation5], 0
    %s19 = scalar_lea.sflag [#allocation5], 1
    %20 = vsyncpa %s19, 0
    loop: start=0, step=1, limit=4
    $region2: #{tpu_custom_call.1} parent=1 // loop_pre_header
      _
    $region3: #{tpu_custom_call.1} parent=1 // loop_header
      %s22 = sphi 0, %s26
      %p23 = scmp.ge.s32.totalorder %s22, 4
      %s32 = sphi 0, %s34
      %s35 = sphi 0, %s32
      %s36 = sphi 0, %s35
      %s52 = sphi 0, %s36
      %s56 = sphi 0, %s56
      %s58 = sphi 0, %s56
      %s59 = sphi 0, %s58
      %s73 = sphi 0, %s59
      %s77 = sphi 0, %s77
      %s79 = sphi 0, %s77
      %s80 = sphi 0, %s79
      %s94 = sphi 0, %s80
      %s98 = sphi 0, %s98
      %s100 = sphi 0, %s98
      %s101 = sphi 0, %s100
      %s115 = sphi 0, %s101
      %s119 = sphi 0, %s119
      %s121 = sphi 0, %s119
      %s122 = sphi 0, %s121
      %s136 = sphi 0, %s122
      %s140 = sphi 0, %s140
      %s142 = sphi 0, %s140
      %s143 = sphi 0, %s142
      %s157 = sphi 0, %s143
      %s161 = sphi 0, %s161
      %s163 = sphi 0, %s161
      %s164 = sphi 0, %s163
      %s178 = sphi 0, %s164
      %s184 = sphi 0, %s186
      %s187 = sphi 0, %s184
      %s188 = sphi 0, %s187
      %s204 = sphi 0, %s188
    $region4: #{tpu_custom_call.1} parent=1 // loop_header_branch
      %25 = sbr.rel (%p23) target = $region8
    $region5: #{tpu_custom_call.1} parent=1 // loop_body
      %s27 = ssub.s32 %s22, 1
      %s28 = ssub.s32 %s22, 2
      %s29 = sadd.s32 %s22, 1
      %s30 = ssub.s32 %s22, %s29
      %p31 = scmp.eq.s32.totalorder %s30, 0
      %s33 = sadd.s32 %s32, 1
      %s34 = scalar_select %p31, %s32, %s33
      %p37 = pneg %p31
      %p38 = scmp.eq.s32.totalorder %s22, 1
      %p39 = por %p37, %p38
      %p40 = scmp.ne.s32.totalorder %s32, %s35
      %p41 = scmp.eq.s32.totalorder %s22, 0
      %p42 = por %p40, %p41
      %p43 = scmp.ne.s32.totalorder %s32, %s35
      %p44 = scmp.eq.s32.totalorder %s27, 1
      %p45 = por %p43, %p44
      %p46 = scmp.ne.s32.totalorder %s35, %s36
      %p47 = scmp.eq.s32.totalorder %s27, 0
      %p48 = por %p46, %p47
      %p49 = scmp.ne.s32.totalorder %s35, %s36
      %p50 = scmp.eq.s32.totalorder %s28, 1
      %p51 = por %p49, %p50
      %p53 = scmp.ne.s32.totalorder %s36, %s52
      %p54 = scmp.eq.s32.totalorder %s28, 0
      %p55 = por %p53, %p54
      %s57 = sadd.s32 %s56, 1
      %p60 = scmp.eq.s32.totalorder %s22, 1
      %p61 = scmp.ne.s32.totalorder %s56, %s58
      %p62 = scmp.eq.s32.totalorder %s22, 0
      %p63 = por %p61, %p62
      %p64 = scmp.ne.s32.totalorder %s56, %s58
      %p65 = scmp.eq.s32.totalorder %s27, 1
      %p66 = por %p64, %p65
      %p67 = scmp.ne.s32.totalorder %s58, %s59
      %p68 = scmp.eq.s32.totalorder %s27, 0
      %p69 = por %p67, %p68
      %p70 = scmp.ne.s32.totalorder %s58, %s59
      %p71 = scmp.eq.s32.totalorder %s28, 1
      %p72 = por %p70, %p71
      %p74 = scmp.ne.s32.totalorder %s59, %s73
      %p75 = scmp.eq.s32.totalorder %s28, 0
      %p76 = por %p74, %p75
      %s78 = sadd.s32 %s77, 1
      %p81 = scmp.eq.s32.totalorder %s22, 1
      %p82 = scmp.ne.s32.totalorder %s77, %s79
      %p83 = scmp.eq.s32.totalorder %s22, 0
      %p84 = por %p82, %p83
      %p85 = scmp.ne.s32.totalorder %s77, %s79
      %p86 = scmp.eq.s32.totalorder %s27, 1
      %p87 = por %p85, %p86
      %p88 = scmp.ne.s32.totalorder %s79, %s80
      %p89 = scmp.eq.s32.totalorder %s27, 0
      %p90 = por %p88, %p89
      %p91 = scmp.ne.s32.totalorder %s79, %s80
      %p92 = scmp.eq.s32.totalorder %s28, 1
      %p93 = por %p91, %p92
      %p95 = scmp.ne.s32.totalorder %s80, %s94
      %p96 = scmp.eq.s32.totalorder %s28, 0
      %p97 = por %p95, %p96
      %s99 = sadd.s32 %s98, 1
      %p102 = scmp.eq.s32.totalorder %s22, 1
      %p103 = scmp.ne.s32.totalorder %s98, %s100
      %p104 = scmp.eq.s32.totalorder %s22, 0
      %p105 = por %p103, %p104
      %p106 = scmp.ne.s32.totalorder %s98, %s100
      %p107 = scmp.eq.s32.totalorder %s27, 1
      %p108 = por %p106, %p107
      %p109 = scmp.ne.s32.totalorder %s100, %s101
      %p110 = scmp.eq.s32.totalorder %s27, 0
      %p111 = por %p109, %p110
      %p112 = scmp.ne.s32.totalorder %s100, %s101
      %p113 = scmp.eq.s32.totalorder %s28, 1
      %p114 = por %p112, %p113
      %p116 = scmp.ne.s32.totalorder %s101, %s115
      %p117 = scmp.eq.s32.totalorder %s28, 0
      %p118 = por %p116, %p117
      %s120 = sadd.s32 %s119, 1
      %p123 = scmp.eq.s32.totalorder %s22, 1
      %p124 = scmp.ne.s32.totalorder %s119, %s121
      %p125 = scmp.eq.s32.totalorder %s22, 0
      %p126 = por %p124, %p125
      %p127 = scmp.ne.s32.totalorder %s119, %s121
      %p128 = scmp.eq.s32.totalorder %s27, 1
      %p129 = por %p127, %p128
      %p130 = scmp.ne.s32.totalorder %s121, %s122
      %p131 = scmp.eq.s32.totalorder %s27, 0
      %p132 = por %p130, %p131
      %p133 = scmp.ne.s32.totalorder %s121, %s122
      %p134 = scmp.eq.s32.totalorder %s28, 1
      %p135 = por %p133, %p134
      %p137 = scmp.ne.s32.totalorder %s122, %s136
      %p138 = scmp.eq.s32.totalorder %s28, 0
      %p139 = por %p137, %p138
      %s141 = sadd.s32 %s140, 1
      %p144 = scmp.eq.s32.totalorder %s22, 1
      %p145 = scmp.ne.s32.totalorder %s140, %s142
      %p146 = scmp.eq.s32.totalorder %s22, 0
      %p147 = por %p145, %p146
      %p148 = scmp.ne.s32.totalorder %s140, %s142
      %p149 = scmp.eq.s32.totalorder %s27, 1
      %p150 = por %p148, %p149
      %p151 = scmp.ne.s32.totalorder %s142, %s143
      %p152 = scmp.eq.s32.totalorder %s27, 0
      %p153 = por %p151, %p152
      %p154 = scmp.ne.s32.totalorder %s142, %s143
      %p155 = scmp.eq.s32.totalorder %s28, 1
      %p156 = por %p154, %p155
      %p158 = scmp.ne.s32.totalorder %s143, %s157
      %p159 = scmp.eq.s32.totalorder %s28, 0
      %p160 = por %p158, %p159
      %s162 = sadd.s32 %s161, 1
      %p165 = scmp.eq.s32.totalorder %s22, 1
      %p166 = scmp.ne.s32.totalorder %s161, %s163
      %p167 = scmp.eq.s32.totalorder %s22, 0
      %p168 = por %p166, %p167
      %p169 = scmp.ne.s32.totalorder %s161, %s163
      %p170 = scmp.eq.s32.totalorder %s27, 1
      %p171 = por %p169, %p170
      %p172 = scmp.ne.s32.totalorder %s163, %s164
      %p173 = scmp.eq.s32.totalorder %s27, 0
      %p174 = por %p172, %p173
      %p175 = scmp.ne.s32.totalorder %s163, %s164
      %p176 = scmp.eq.s32.totalorder %s28, 1
      %p177 = por %p175, %p176
      %p179 = scmp.ne.s32.totalorder %s164, %s178
      %p180 = scmp.eq.s32.totalorder %s28, 0
      %p181 = por %p179, %p180
      %s182 = ssub.s32 %s22, %s29
      %p183 = scmp.eq.s32.totalorder %s182, 0
      %s185 = sadd.s32 %s184, 1
      %s186 = scalar_select %p183, %s184, %s185
      %p189 = pneg %p183
      %p190 = scmp.eq.s32.totalorder %s22, 1
      %p191 = por %p189, %p190
      %p192 = scmp.ne.s32.totalorder %s184, %s187
      %p193 = scmp.eq.s32.totalorder %s22, 0
      %p194 = por %p192, %p193
      %p195 = scmp.ne.s32.totalorder %s184, %s187
      %p196 = scmp.eq.s32.totalorder %s27, 1
      %p197 = por %p195, %p196
      %p198 = scmp.ne.s32.totalorder %s187, %s188
      %p199 = scmp.eq.s32.totalorder %s27, 0
      %p200 = por %p198, %p199
      %p201 = scmp.ne.s32.totalorder %s187, %s188
      %p202 = scmp.eq.s32.totalorder %s28, 1
      %p203 = por %p201, %p202
      %p205 = scmp.ne.s32.totalorder %s188, %s204
      %p206 = scmp.eq.s32.totalorder %s28, 0
      %p207 = por %p205, %p206
      %p208 = scmp.le.s32.totalorder 1, %s22
      %p209 = scmp.lt.s32.totalorder %s22, 3
      %p210 = pnand %p208, %p209
      %p211 = pneg %p210
      // Predicated region
      $region9: #{tpu_custom_call.1} parent=5 // pred_check
        _
      $region10: #{tpu_custom_call.1} parent=5 // pred_check_branch
        %213 = sbr.rel (%p210) target = $region12
      $region11: #{tpu_custom_call.1} parent=5 // pred_region
        %s214 = ssub.s32 %s22, 1
        // Predicated region
        $region13: #{tpu_custom_call.1} parent=11 // pred_check
          %p215 = pneg %p69
        $region14: #{tpu_custom_call.1} parent=11 // pred_check_branch
          %217 = sbr.rel (%p215) target = $region16
        $region15: #{tpu_custom_call.1} parent=11 // pred_region
          %s219 = ssub.s32 1024, 1024
          %220 = vsyncadd [#allocation7], %s219
          %s221 = sshll.u32 [#allocation6], 4
          %s222 = int_to_ptr.vmem [resolvable:$true] %s221
          %227 = dma.hbm_to_vmem [thread:$0]  %s1, 1024, %s222, [#allocation7], 64, 64, 4
        $region16: #{tpu_custom_call.1} parent=11 // pred_fallthru
          _
        // Predicated region
        $region17: #{tpu_custom_call.1} parent=11 // pred_check
          %p228 = pneg %p90
        $region18: #{tpu_custom_call.1} parent=11 // pred_check_branch
          %230 = sbr.rel (%p228) target = $region20
        $region19: #{tpu_custom_call.1} parent=11 // pred_region
          _
        $region20: #{tpu_custom_call.1} parent=11 // pred_fallthru
          _
        // Predicated region
        $region21: #{tpu_custom_call.1} parent=11 // pred_check
          %p231 = pneg %p111
        $region22: #{tpu_custom_call.1} parent=11 // pred_check_branch
          %233 = sbr.rel (%p231) target = $region24
        $region23: #{tpu_custom_call.1} parent=11 // pred_region
          %s235 = ssub.s32 1024, 1024
          %236 = vsyncadd [#allocation7], %s235
          %s237 = sshll.u32 [#allocation8], 4
          %s238 = int_to_ptr.vmem [resolvable:$true] %s237
          %243 = dma.hbm_to_vmem [thread:$0]  %s3, 1024, %s238, [#allocation7], 64, 64, 4
        $region24: #{tpu_custom_call.1} parent=11 // pred_fallthru
          _
        // Predicated region
        $region25: #{tpu_custom_call.1} parent=11 // pred_check
          %p244 = pneg %p132
        $region26: #{tpu_custom_call.1} parent=11 // pred_check_branch
          %246 = sbr.rel (%p244) target = $region28
        $region27: #{tpu_custom_call.1} parent=11 // pred_region
          _
        $region28: #{tpu_custom_call.1} parent=11 // pred_fallthru
          _
        // Predicated region
        $region29: #{tpu_custom_call.1} parent=11 // pred_check
          %p247 = pneg %p153
        $region30: #{tpu_custom_call.1} parent=11 // pred_check_branch
          %249 = sbr.rel (%p247) target = $region32
        $region31: #{tpu_custom_call.1} parent=11 // pred_region
          _
        $region32: #{tpu_custom_call.1} parent=11 // pred_fallthru
          _
        // Predicated region
        $region33: #{tpu_custom_call.1} parent=11 // pred_check
          %p250 = pneg %p174
        $region34: #{tpu_custom_call.1} parent=11 // pred_check_branch
          %252 = sbr.rel (%p250) target = $region36
        $region35: #{tpu_custom_call.1} parent=11 // pred_region
          _
        $region36: #{tpu_custom_call.1} parent=11 // pred_fallthru
          _
      $region12: #{tpu_custom_call.1} parent=5 // pred_fallthru
        _
      %p253 = scmp.lt.s32.totalorder %s22, 2
      // Predicated region
      $region37: #{tpu_custom_call.1} parent=5 // pred_check
        %p254 = pneg %p253
      $region38: #{tpu_custom_call.1} parent=5 // pred_check_branch
        %256 = sbr.rel (%p254) target = $region40
      $region39: #{tpu_custom_call.1} parent=5 // pred_region
        // Predicated region
        $region41: #{tpu_custom_call.1} parent=39 // pred_check
          %p257 = pneg %p42
        $region42: #{tpu_custom_call.1} parent=39 // pred_check_branch
          %259 = sbr.rel (%p257) target = $region44
        $region43: #{tpu_custom_call.1} parent=39 // pred_region
          %s260 = sand.u32 %s32, 1
          %s261 = scalar_lea.sflag [#allocation4], %s260
          %s262 = sand.u32 %s32, 1
          %s263 = smul.addr %s262, 64
          %s264 = scalar_lea.vmem [#allocation3], %s263
          %s265 = smul.u32 16, %s22
          %s267 = ssub.s32 1024, 1024
          %268 = vsyncadd %s261, %s267
          %s269 = smul.addr %s265, 64
          %s270 = scalar_lea.hbm %s0, %s269
          %s271 = sshll.u32 %s264, 4
          %s272 = int_to_ptr.vmem [resolvable:$true] %s271
          %277 = dma.hbm_to_vmem [thread:$0]  %s270, 1024, %s272, %s261, 64, 64, 4
        $region44: #{tpu_custom_call.1} parent=39 // pred_fallthru
          _
      $region40: #{tpu_custom_call.1} parent=5 // pred_fallthru
        _
      %p278 = scmp.le.s32.totalorder 1, %s22
      %p279 = scmp.lt.s32.totalorder %s22, 3
      %p280 = pnand %p278, %p279
      %p281 = pneg %p280
      // Predicated region
      $region45: #{tpu_custom_call.1} parent=5 // pred_check
        _
      $region46: #{tpu_custom_call.1} parent=5 // pred_check_branch
        %283 = sbr.rel (%p280) target = $region48
      $region47: #{tpu_custom_call.1} parent=5 // pred_region
        %s284 = ssub.s32 %s22, 1
        %s285 = sand.u32 %s35, 1
        %s286 = scalar_lea.sflag [#allocation4], %s285
        %s287 = sand.u32 %s35, 1
        %s288 = smul.addr %s287, 64
        %s289 = scalar_lea.vmem [#allocation3], %s288
        // Predicated region
        $region49: #{tpu_custom_call.1} parent=47 // pred_check
          %p290 = pneg %p48
        $region50: #{tpu_custom_call.1} parent=47 // pred_check_branch
          %292 = sbr.rel (%p290) target = $region52
        $region51: #{tpu_custom_call.1} parent=47 // pred_region
          %293 = dma.done %s286, 1024
        $region52: #{tpu_custom_call.1} parent=47 // pred_fallthru
          _
        // Predicated region
        $region53: #{tpu_custom_call.1} parent=47 // pred_check
          %p294 = pneg %p69
        $region54: #{tpu_custom_call.1} parent=47 // pred_check_branch
          %296 = sbr.rel (%p294) target = $region56
        $region55: #{tpu_custom_call.1} parent=47 // pred_region
          %297 = dma.done [#allocation7], 1024
        $region56: #{tpu_custom_call.1} parent=47 // pred_fallthru
          _
        // Predicated region
        $region57: #{tpu_custom_call.1} parent=47 // pred_check
          %p298 = pneg %p111
        $region58: #{tpu_custom_call.1} parent=47 // pred_check_branch
          %300 = sbr.rel (%p298) target = $region60
        $region59: #{tpu_custom_call.1} parent=47 // pred_region
          %301 = dma.done [#allocation7], 1024
        $region60: #{tpu_custom_call.1} parent=47 // pred_fallthru
          _
        %s302 = sand.u32 %s35, 1
        %s303 = scalar_lea.sflag [#allocation4], %s302
        %s304 = sand.u32 %s35, 1
        %s305 = smul.addr %s304, 64
        %s306 = scalar_lea.vmem [#allocation3], %s305
        %p307 = pneg %p48
        %p308 = pneg %p45
        %p309 = pneg %p69
        %p310 = pneg %p66
        %p311 = pneg %p90
        %p312 = pneg %p87
        %p313 = pneg %p111
        %p314 = pneg %p108
        %p315 = pneg %p132
        %p316 = pneg %p129
        %p317 = pneg %p153
        %p318 = pneg %p150
        %p319 = pneg %p174
        %p320 = pneg %p171
        %p321 = pneg %p200
        %p322 = pneg %p197
        %s323 = sand.u32 %s187, 1
        %s324 = scalar_lea.sflag [#allocation5], %s323
        %s325 = sand.u32 %s187, 1
        %s326 = scalar_lea.vmem [#allocation9], %s325
        %s327 = smul.u32 16, %s27
        %v329 = vld [vmem:[%s289] sm:$0xf]
        %v330 = vld [vmem:[%s289 + $0x4] sm:$0xf]
        %v331 = vld [vmem:[%s289 + $0x8] sm:$0xf]
        %v332 = vld [vmem:[%s289 + $0xc] sm:$0xf]
        %v333 = vld [vmem:[%s289 + $0x10] sm:$0xf]
        %v334 = vld [vmem:[%s289 + $0x14] sm:$0xf]
        %v335 = vld [vmem:[%s289 + $0x18] sm:$0xf]
        %v336 = vld [vmem:[%s289 + $0x1c] sm:$0xf]
        %v337 = vld [vmem:[%s289 + $0x20] sm:$0xf]
        %v338 = vld [vmem:[%s289 + $0x24] sm:$0xf]
        %v339 = vld [vmem:[%s289 + $0x28] sm:$0xf]
        %v340 = vld [vmem:[%s289 + $0x2c] sm:$0xf]
        %v341 = vld [vmem:[%s289 + $0x30] sm:$0xf]
        %v342 = vld [vmem:[%s289 + $0x34] sm:$0xf]
        %v343 = vld [vmem:[%s289 + $0x38] sm:$0xf]
        %v344 = vld [vmem:[%s289 + $0x3c] sm:$0xf]
        %v345 = vld [vmem:[#allocation6] sm:$0xf]
        %v346 = vld [vmem:[#allocation6 + $0x4] sm:$0xf]
        %v347 = vld [vmem:[#allocation6 + $0x8] sm:$0xf]
        %v348 = vld [vmem:[#allocation6 + $0xc] sm:$0xf]
        %v349 = vld [vmem:[#allocation6 + $0x10] sm:$0xf]
        %v350 = vld [vmem:[#allocation6 + $0x14] sm:$0xf]
        %v351 = vld [vmem:[#allocation6 + $0x18] sm:$0xf]
        %v352 = vld [vmem:[#allocation6 + $0x1c] sm:$0xf]
        %v353 = vld [vmem:[#allocation6 + $0x20] sm:$0xf]
        %v354 = vld [vmem:[#allocation6 + $0x24] sm:$0xf]
        %v355 = vld [vmem:[#allocation6 + $0x28] sm:$0xf]
        %v356 = vld [vmem:[#allocation6 + $0x2c] sm:$0xf]
        %v357 = vld [vmem:[#allocation6 + $0x30] sm:$0xf]
        %v358 = vld [vmem:[#allocation6 + $0x34] sm:$0xf]
        %v359 = vld [vmem:[#allocation6 + $0x38] sm:$0xf]
        %v360 = vld [vmem:[#allocation6 + $0x3c] sm:$0xf]
        %v361 = vld [vmem:[%s2] sm:$0x1]
        %v363 = vlaneseq
        %v364 = vshrl.u32 %v363, 7
        %v365 = vsub.s32 0, %v364
        %v366 = vrot.slane %v361, %v365
        %v384 = vunpack.c.l.b16 %v329
        %v385 = vunpack.c.l.b16 %v330
        %v386 = vunpack.c.l.b16 %v331
        %v387 = vunpack.c.l.b16 %v332
        %v388 = vunpack.c.l.b16 %v333
        %v389 = vunpack.c.l.b16 %v334
        %v390 = vunpack.c.l.b16 %v335
        %v391 = vunpack.c.l.b16 %v336
        %v392 = vunpack.c.l.b16 %v337
        %v393 = vunpack.c.l.b16 %v338
        %v394 = vunpack.c.l.b16 %v339
        %v395 = vunpack.c.l.b16 %v340
        %v396 = vunpack.c.l.b16 %v341
        %v397 = vunpack.c.l.b16 %v342
        %v398 = vunpack.c.l.b16 %v343
        %v399 = vunpack.c.l.b16 %v344
        %v400 = vpack.c.b16 %v385, %v384
        %v401 = vpack.c.b16 %v387, %v386
        %v402 = vpack.c.b16 %v389, %v388
        %v403 = vpack.c.b16 %v391, %v390
        %v404 = vpack.c.b16 %v393, %v392
        %v405 = vpack.c.b16 %v395, %v394
        %v406 = vpack.c.b16 %v397, %v396
        %v407 = vpack.c.b16 %v399, %v398
        %v432 = vunpack.c.l.b16 %v345
        %v433 = vunpack.c.l.b16 %v346
        %v434 = vunpack.c.l.b16 %v347
        %v435 = vunpack.c.l.b16 %v348
        %v436 = vunpack.c.l.b16 %v349
        %v437 = vunpack.c.l.b16 %v350
        %v438 = vunpack.c.l.b16 %v351
        %v439 = vunpack.c.l.b16 %v352
        %v440 = vunpack.c.l.b16 %v353
        %v441 = vunpack.c.l.b16 %v354
        %v442 = vunpack.c.l.b16 %v355
        %v443 = vunpack.c.l.b16 %v356
        %v444 = vunpack.c.l.b16 %v357
        %v445 = vunpack.c.l.b16 %v358
        %v446 = vunpack.c.l.b16 %v359
        %v447 = vunpack.c.l.b16 %v360
        %v448 = vpack.c.b16 %v433, %v432
        %v449 = vpack.c.b16 %v435, %v434
        %v450 = vpack.c.b16 %v437, %v436
        %v451 = vpack.c.b16 %v439, %v438
        %v452 = vpack.c.b16 %v441, %v440
        %v453 = vpack.c.b16 %v443, %v442
        %v454 = vpack.c.b16 %v445, %v444
        %v455 = vpack.c.b16 %v447, %v446
        %464 = vmatprep.subr.bf16.mxu0 0
        %465 = vmatpush1.bf16.msra.mxu0 %v448
        %466 = vmatprep.subr.bf16.mxu0 0
        %467 = vmatpush1.bf16.msra.mxu0 %v449
        %468 = vmatprep.subr.bf16.mxu0 0
        %469 = vmatpush1.bf16.msra.mxu0 %v450
        %470 = vmatprep.subr.bf16.mxu0 0
        %471 = vmatpush1.bf16.msra.mxu0 %v451
        %472 = vmatprep.subr.bf16.mxu0 0
        %473 = vmatpush1.bf16.msra.mxu0 %v452
        %474 = vmatprep.subr.bf16.mxu0 0
        %475 = vmatpush1.bf16.msra.mxu0 %v453
        %476 = vmatprep.subr.bf16.mxu0 0
        %477 = vmatpush1.bf16.msra.mxu0 %v454
        %478 = vmatprep.subr.bf16.mxu0 0
        %479 = vmatpush1.bf16.msra.mxu0 %v455
        %480 = vmatprep.subr.bf16.mxu0 0
        %481 = vmatpush1.bf16.msra.mxu0 0
        %482 = vmatprep.subr.bf16.mxu0 0
        %483 = vmatpush1.bf16.msra.mxu0 0
        %484 = vmatprep.subr.bf16.mxu0 0
        %485 = vmatpush1.bf16.msra.mxu0 0
        %486 = vmatprep.subr.bf16.mxu0 0
        %487 = vmatpush1.bf16.msra.mxu0 0
        %488 = vmatprep.subr.bf16.mxu0 0
        %489 = vmatpush1.bf16.msra.mxu0 0
        %490 = vmatprep.subr.bf16.mxu0 0
        %491 = vmatpush1.bf16.msra.mxu0 0
        %492 = vmatprep.subr.bf16.mxu0 0
        %493 = vmatpush1.bf16.msra.mxu0 0
        %494 = vmatprep.subr.bf16.mxu0 0
        %495 = vmatpush1.bf16.msra.mxu0 0
        %496 = vmatprep.mubr.bf16.mxu0 0
        %497 = vmatmul.mubr.bf16.gmra.mrb[0].mxu0 %v400
        %v498 = vpop.f32.mrb[0].mxu0
        %v499 = vadd.f32 %v366, %v498
        %v500 = vpop.f32.mrb[0].mxu0
        %v501 = vpop.f32.mrb[0].mxu0
        %v502 = vadd.f32 %v366, %v501
        %v503 = vpop.f32.mrb[0].mxu0
        %504 = vmatprep.mubr.bf16.mxu0 0
        %505 = vmatmul.mubr.bf16.gmra.mrb[0].mxu0 %v401
        %v506 = vpop.f32.mrb[0].mxu0
        %v507 = vadd.f32 %v366, %v506
        %v508 = vpop.f32.mrb[0].mxu0
        %v509 = vpop.f32.mrb[0].mxu0
        %v510 = vadd.f32 %v366, %v509
        %v511 = vpop.f32.mrb[0].mxu0
        %512 = vmatprep.mubr.bf16.mxu0 0
        %513 = vmatmul.mubr.bf16.gmra.mrb[0].mxu0 %v402
        %v514 = vpop.f32.mrb[0].mxu0
        %v515 = vadd.f32 %v366, %v514
        %v516 = vpop.f32.mrb[0].mxu0
        %v517 = vpop.f32.mrb[0].mxu0
        %v518 = vadd.f32 %v366, %v517
        %v519 = vpop.f32.mrb[0].mxu0
        %520 = vmatprep.mubr.bf16.mxu0 0
        %521 = vmatmul.mubr.bf16.gmra.mrb[0].mxu0 %v403
        %v522 = vpop.f32.mrb[0].mxu0
        %v523 = vadd.f32 %v366, %v522
        %v524 = vpop.f32.mrb[0].mxu0
        %v525 = vpop.f32.mrb[0].mxu0
        %v526 = vadd.f32 %v366, %v525
        %v527 = vpop.f32.mrb[0].mxu0
        %528 = vmatprep.mubr.bf16.mxu0 0
        %529 = vmatmul.mubr.bf16.gmra.mrb[0].mxu0 %v404
        %v530 = vpop.f32.mrb[0].mxu0
        %v531 = vadd.f32 %v366, %v530
        %v532 = vpop.f32.mrb[0].mxu0
        %v533 = vpop.f32.mrb[0].mxu0
        %v534 = vadd.f32 %v366, %v533
        %v535 = vpop.f32.mrb[0].mxu0
        %536 = vmatprep.mubr.bf16.mxu0 0
        %537 = vmatmul.mubr.bf16.gmra.mrb[0].mxu0 %v405
        %v538 = vpop.f32.mrb[0].mxu0
        %v539 = vadd.f32 %v366, %v538
        %v540 = vpop.f32.mrb[0].mxu0
        %v541 = vpop.f32.mrb[0].mxu0
        %v542 = vadd.f32 %v366, %v541
        %v543 = vpop.f32.mrb[0].mxu0
        %544 = vmatprep.mubr.bf16.mxu0 0
        %545 = vmatmul.mubr.bf16.gmra.mrb[0].mxu0 %v406
        %v546 = vpop.f32.mrb[0].mxu0
        %v547 = vadd.f32 %v366, %v546
        %v548 = vpop.f32.mrb[0].mxu0
        %v549 = vpop.f32.mrb[0].mxu0
        %v550 = vadd.f32 %v366, %v549
        %v551 = vpop.f32.mrb[0].mxu0
        %552 = vmatprep.mubr.bf16.mxu0 0
        %553 = vmatmul.mubr.bf16.gmra.mrb[0].mxu0 %v407
        %v554 = vpop.f32.mrb[0].mxu0
        %v555 = vadd.f32 %v366, %v554
        %v556 = vpop.f32.mrb[0].mxu0
        %v557 = vpop.f32.mrb[0].mxu0
        %v558 = vadd.f32 %v366, %v557
        %v559 = vpop.f32.mrb[0].mxu0
        %560 = vdwg.mxu0
        %v561 = vunpack.c.l.bf16 %v329
        %v562 = vunpack.c.l.bf16 %v330
        %v563 = vunpack.c.l.bf16 %v331
        %v564 = vunpack.c.l.bf16 %v332
        %v565 = vunpack.c.l.bf16 %v333
        %v566 = vunpack.c.l.bf16 %v334
        %v567 = vunpack.c.l.bf16 %v335
        %v568 = vunpack.c.l.bf16 %v336
        %v569 = vunpack.c.l.bf16 %v337
        %v570 = vunpack.c.l.bf16 %v338
        %v571 = vunpack.c.l.bf16 %v339
        %v572 = vunpack.c.l.bf16 %v340
        %v573 = vunpack.c.l.bf16 %v341
        %v574 = vunpack.c.l.bf16 %v342
        %v575 = vunpack.c.l.bf16 %v343
        %v576 = vunpack.c.l.bf16 %v344
        %v577 = vadd.f32 %v499, %v561
        %v578 = vadd.f32 %v502, %v562
        %v579 = vadd.f32 %v507, %v563
        %v580 = vadd.f32 %v510, %v564
        %v581 = vadd.f32 %v515, %v565
        %v582 = vadd.f32 %v518, %v566
        %v583 = vadd.f32 %v523, %v567
        %v584 = vadd.f32 %v526, %v568
        %v585 = vadd.f32 %v531, %v569
        %v586 = vadd.f32 %v534, %v570
        %v587 = vadd.f32 %v539, %v571
        %v588 = vadd.f32 %v542, %v572
        %v589 = vadd.f32 %v547, %v573
        %v590 = vadd.f32 %v550, %v574
        %v591 = vadd.f32 %v555, %v575
        %v592 = vadd.f32 %v558, %v576
        %v593 = vmax.f32 %v577, 0.0
        %v594 = vmax.f32 %v578, 0.0
        %v595 = vmax.f32 %v579, 0.0
        %v596 = vmax.f32 %v580, 0.0
        %v597 = vmax.f32 %v581, 0.0
        %v598 = vmax.f32 %v582, 0.0
        %v599 = vmax.f32 %v583, 0.0
        %v600 = vmax.f32 %v584, 0.0
        %v601 = vmax.f32 %v585, 0.0
        %v602 = vmax.f32 %v586, 0.0
        %v603 = vmax.f32 %v587, 0.0
        %v604 = vmax.f32 %v588, 0.0
        %v605 = vmax.f32 %v589, 0.0
        %v606 = vmax.f32 %v590, 0.0
        %v607 = vmax.f32 %v591, 0.0
        %v608 = vmax.f32 %v592, 0.0
        %v609 = vpack.c.bf16 %v594, %v593
        %v610 = vpack.c.bf16 %v596, %v595
        %v611 = vpack.c.bf16 %v598, %v597
        %v612 = vpack.c.bf16 %v600, %v599
        %v613 = vpack.c.bf16 %v602, %v601
        %v614 = vpack.c.bf16 %v604, %v603
        %v615 = vpack.c.bf16 %v606, %v605
        %v616 = vpack.c.bf16 %v608, %v607
        %v617 = vld [vmem:[#allocation8] sm:$0xf]
        %v618 = vld [vmem:[#allocation8 + $0x4] sm:$0xf]
        %v619 = vld [vmem:[#allocation8 + $0x8] sm:$0xf]
        %v620 = vld [vmem:[#allocation8 + $0xc] sm:$0xf]
        %v621 = vld [vmem:[#allocation8 + $0x10] sm:$0xf]
        %v622 = vld [vmem:[#allocation8 + $0x14] sm:$0xf]
        %v623 = vld [vmem:[#allocation8 + $0x18] sm:$0xf]
        %v624 = vld [vmem:[#allocation8 + $0x1c] sm:$0xf]
        %v625 = vld [vmem:[#allocation8 + $0x20] sm:$0xf]
        %v626 = vld [vmem:[#allocation8 + $0x24] sm:$0xf]
        %v627 = vld [vmem:[#allocation8 + $0x28] sm:$0xf]
        %v628 = vld [vmem:[#allocation8 + $0x2c] sm:$0xf]
        %v629 = vld [vmem:[#allocation8 + $0x30] sm:$0xf]
        %v630 = vld [vmem:[#allocation8 + $0x34] sm:$0xf]
        %v631 = vld [vmem:[#allocation8 + $0x38] sm:$0xf]
        %v632 = vld [vmem:[#allocation8 + $0x3c] sm:$0xf]
        %v633 = vld [vmem:[%s4] sm:$0x1]
        %v635 = vlaneseq
        %v636 = vshrl.u32 %v635, 7
        %v637 = vsub.s32 0, %v636
        %v638 = vrot.slane %v633, %v637
        %v656 = vunpack.c.l.b16 %v617
        %v657 = vunpack.c.l.b16 %v618
        %v658 = vunpack.c.l.b16 %v619
        %v659 = vunpack.c.l.b16 %v620
        %v660 = vunpack.c.l.b16 %v621
        %v661 = vunpack.c.l.b16 %v622
        %v662 = vunpack.c.l.b16 %v623
        %v663 = vunpack.c.l.b16 %v624
        %v664 = vunpack.c.l.b16 %v625
        %v665 = vunpack.c.l.b16 %v626
        %v666 = vunpack.c.l.b16 %v627
        %v667 = vunpack.c.l.b16 %v628
        %v668 = vunpack.c.l.b16 %v629
        %v669 = vunpack.c.l.b16 %v630
        %v670 = vunpack.c.l.b16 %v631
        %v671 = vunpack.c.l.b16 %v632
        %v672 = vpack.c.b16 %v657, %v656
        %v673 = vpack.c.b16 %v659, %v658
        %v674 = vpack.c.b16 %v661, %v660
        %v675 = vpack.c.b16 %v663, %v662
        %v676 = vpack.c.b16 %v665, %v664
        %v677 = vpack.c.b16 %v667, %v666
        %v678 = vpack.c.b16 %v669, %v668
        %v679 = vpack.c.b16 %v671, %v670
        %688 = vmatprep.subr.bf16.mxu0 0
        %689 = vmatpush1.bf16.msra.mxu0 %v672
        %690 = vmatprep.subr.bf16.mxu0 0
        %691 = vmatpush1.bf16.msra.mxu0 %v673
        %692 = vmatprep.subr.bf16.mxu0 0
        %693 = vmatpush1.bf16.msra.mxu0 %v674
        %694 = vmatprep.subr.bf16.mxu0 0
        %695 = vmatpush1.bf16.msra.mxu0 %v675
        %696 = vmatprep.subr.bf16.mxu0 0
        %697 = vmatpush1.bf16.msra.mxu0 %v676
        %698 = vmatprep.subr.bf16.mxu0 0
        %699 = vmatpush1.bf16.msra.mxu0 %v677
        %700 = vmatprep.subr.bf16.mxu0 0
        %701 = vmatpush1.bf16.msra.mxu0 %v678
        %702 = vmatprep.subr.bf16.mxu0 0
        %703 = vmatpush1.bf16.msra.mxu0 %v679
        %704 = vmatprep.subr.bf16.mxu0 0
        %705 = vmatpush1.bf16.msra.mxu0 0
        %706 = vmatprep.subr.bf16.mxu0 0
        %707 = vmatpush1.bf16.msra.mxu0 0
        %708 = vmatprep.subr.bf16.mxu0 0
        %709 = vmatpush1.bf16.msra.mxu0 0
        %710 = vmatprep.subr.bf16.mxu0 0
        %711 = vmatpush1.bf16.msra.mxu0 0
        %712 = vmatprep.subr.bf16.mxu0 0
        %713 = vmatpush1.bf16.msra.mxu0 0
        %714 = vmatprep.subr.bf16.mxu0 0
        %715 = vmatpush1.bf16.msra.mxu0 0
        %716 = vmatprep.subr.bf16.mxu0 0
        %717 = vmatpush1.bf16.msra.mxu0 0
        %718 = vmatprep.subr.bf16.mxu0 0
        %719 = vmatpush1.bf16.msra.mxu0 0
        %720 = vmatprep.mubr.bf16.mxu0 0
        %721 = vmatmul.mubr.bf16.gmra.mrb[0].mxu0 %v609
        %v722 = vpop.f32.mrb[0].mxu0
        %v723 = vadd.f32 %v638, %v722
        %v724 = vpop.f32.mrb[0].mxu0
        %v725 = vpop.f32.mrb[0].mxu0
        %v726 = vadd.f32 %v638, %v725
        %v727 = vpop.f32.mrb[0].mxu0
        %728 = vmatprep.mubr.bf16.mxu0 0
        %729 = vmatmul.mubr.bf16.gmra.mrb[0].mxu0 %v610
        %v730 = vpop.f32.mrb[0].mxu0
        %v731 = vadd.f32 %v638, %v730
        %v732 = vpop.f32.mrb[0].mxu0
        %v733 = vpop.f32.mrb[0].mxu0
        %v734 = vadd.f32 %v638, %v733
        %v735 = vpop.f32.mrb[0].mxu0
        %736 = vmatprep.mubr.bf16.mxu0 0
        %737 = vmatmul.mubr.bf16.gmra.mrb[0].mxu0 %v611
        %v738 = vpop.f32.mrb[0].mxu0
        %v739 = vadd.f32 %v638, %v738
        %v740 = vpop.f32.mrb[0].mxu0
        %v741 = vpop.f32.mrb[0].mxu0
        %v742 = vadd.f32 %v638, %v741
        %v743 = vpop.f32.mrb[0].mxu0
        %744 = vmatprep.mubr.bf16.mxu0 0
        %745 = vmatmul.mubr.bf16.gmra.mrb[0].mxu0 %v612
        %v746 = vpop.f32.mrb[0].mxu0
        %v747 = vadd.f32 %v638, %v746
        %v748 = vpop.f32.mrb[0].mxu0
        %v749 = vpop.f32.mrb[0].mxu0
        %v750 = vadd.f32 %v638, %v749
        %v751 = vpop.f32.mrb[0].mxu0
        %752 = vmatprep.mubr.bf16.mxu0 0
        %753 = vmatmul.mubr.bf16.gmra.mrb[0].mxu0 %v613
        %v754 = vpop.f32.mrb[0].mxu0
        %v755 = vadd.f32 %v638, %v754
        %v756 = vpop.f32.mrb[0].mxu0
        %v757 = vpop.f32.mrb[0].mxu0
        %v758 = vadd.f32 %v638, %v757
        %v759 = vpop.f32.mrb[0].mxu0
        %760 = vmatprep.mubr.bf16.mxu0 0
        %761 = vmatmul.mubr.bf16.gmra.mrb[0].mxu0 %v614
        %v762 = vpop.f32.mrb[0].mxu0
        %v763 = vadd.f32 %v638, %v762
        %v764 = vpop.f32.mrb[0].mxu0
        %v765 = vpop.f32.mrb[0].mxu0
        %v766 = vadd.f32 %v638, %v765
        %v767 = vpop.f32.mrb[0].mxu0
        %768 = vmatprep.mubr.bf16.mxu0 0
        %769 = vmatmul.mubr.bf16.gmra.mrb[0].mxu0 %v615
        %v770 = vpop.f32.mrb[0].mxu0
        %v771 = vadd.f32 %v638, %v770
        %v772 = vpop.f32.mrb[0].mxu0
        %v773 = vpop.f32.mrb[0].mxu0
        %v774 = vadd.f32 %v638, %v773
        %v775 = vpop.f32.mrb[0].mxu0
        %776 = vmatprep.mubr.bf16.mxu0 0
        %777 = vmatmul.mubr.bf16.gmra.mrb[0].mxu0 %v616
        %v778 = vpop.f32.mrb[0].mxu0
        %v779 = vadd.f32 %v638, %v778
        %v780 = vpop.f32.mrb[0].mxu0
        %v781 = vpop.f32.mrb[0].mxu0
        %v782 = vadd.f32 %v638, %v781
        %v783 = vpop.f32.mrb[0].mxu0
        %784 = vdwg.mxu0
        %v785 = vadd.f32 %v723, %v577
        %v786 = vadd.f32 %v726, %v578
        %v787 = vadd.f32 %v731, %v579
        %v788 = vadd.f32 %v734, %v580
        %v789 = vadd.f32 %v739, %v581
        %v790 = vadd.f32 %v742, %v582
        %v791 = vadd.f32 %v747, %v583
        %v792 = vadd.f32 %v750, %v584
        %v793 = vadd.f32 %v755, %v585
        %v794 = vadd.f32 %v758, %v586
        %v795 = vadd.f32 %v763, %v587
        %v796 = vadd.f32 %v766, %v588
        %v797 = vadd.f32 %v771, %v589
        %v798 = vadd.f32 %v774, %v590
        %v799 = vadd.f32 %v779, %v591
        %v800 = vadd.f32 %v782, %v592
        %v801 = vmax.f32 %v785, 0.0
        %v802 = vmax.f32 %v786, 0.0
        %v803 = vmax.f32 %v787, 0.0
        %v804 = vmax.f32 %v788, 0.0
        %v805 = vmax.f32 %v789, 0.0
        %v806 = vmax.f32 %v790, 0.0
        %v807 = vmax.f32 %v791, 0.0
        %v808 = vmax.f32 %v792, 0.0
        %v809 = vmax.f32 %v793, 0.0
        %v810 = vmax.f32 %v794, 0.0
        %v811 = vmax.f32 %v795, 0.0
        %v812 = vmax.f32 %v796, 0.0
        %v813 = vmax.f32 %v797, 0.0
        %v814 = vmax.f32 %v798, 0.0
        %v815 = vmax.f32 %v799, 0.0
        %v816 = vmax.f32 %v800, 0.0
        %v817 = vld [vmem:[%s5] sm:$0x1]
        %v818 = vld [vmem:[#allocation2] sm:$0x1]
        %820 = vset.pattern.permute.xlu0 0
        %821 = vperm.xlu0 %820, %v818
        %v822 = vpop.permute.xlu0 %821
        %v824 = vlaneseq
        %v825 = vshrl.u32 %v824, 7
        %v826 = vsub.s32 0, %v825
        %v827 = vrot.slane %v822, %v826
        %828 = vmatprep.subr.mxu0 0.0
        %829 = vmatpush1.xpose.msra.mxu0 %v801
        %830 = vmatprep.subr.mxu0 0.0
        %831 = vmatpush1.xpose.msra.mxu0 %v802
        %832 = vmatprep.subr.mxu0 0.0
        %833 = vmatpush1.xpose.msra.mxu0 %v803
        %834 = vmatprep.subr.mxu0 0.0
        %835 = vmatpush1.xpose.msra.mxu0 %v804
        %836 = vmatprep.subr.mxu0 0.0
        %837 = vmatpush1.xpose.msra.mxu0 %v805
        %838 = vmatprep.subr.mxu0 0.0
        %839 = vmatpush1.xpose.msra.mxu0 %v806
        %840 = vmatprep.subr.mxu0 0.0
        %841 = vmatpush1.xpose.msra.mxu0 %v807
        %842 = vmatprep.subr.mxu0 0.0
        %843 = vmatpush1.xpose.msra.mxu0 %v808
        %844 = vmatprep.subr.mxu0 0.0
        %845 = vmatpush1.xpose.msra.mxu0 %v809
        %846 = vmatprep.subr.mxu0 0.0
        %847 = vmatpush1.xpose.msra.mxu0 %v810
        %848 = vmatprep.subr.mxu0 0.0
        %849 = vmatpush1.xpose.msra.mxu0 %v811
        %850 = vmatprep.subr.mxu0 0.0
        %851 = vmatpush1.xpose.msra.mxu0 %v812
        %852 = vmatprep.subr.mxu0 0.0
        %853 = vmatpush1.xpose.msra.mxu0 %v813
        %854 = vmatprep.subr.mxu0 0.0
        %855 = vmatpush1.xpose.msra.mxu0 %v814
        %856 = vmatprep.subr.mxu0 0.0
        %857 = vmatpush1.xpose.msra.mxu0 %v815
        %858 = vmatprep.subr.mxu0 0.0
        %859 = vmatpush1.xpose.msra.mxu0 %v816
        %860 = vmatprep.subr.mxu0 0.0
        %861 = vmatpush1.xpose.msra.mxu0 0.0
        %862 = vmatprep.subr.mxu0 0.0
        %863 = vmatpush1.xpose.msra.mxu0 0.0
        %864 = vmatprep.subr.mxu0 0.0
        %865 = vmatpush1.xpose.msra.mxu0 0.0
        %866 = vmatprep.subr.mxu0 0.0
        %867 = vmatpush1.xpose.msra.mxu0 0.0
        %868 = vmatprep.subr.mxu0 0.0
        %869 = vmatpush1.xpose.msra.mxu0 0.0
        %870 = vmatprep.subr.mxu0 0.0
        %871 = vmatpush1.xpose.msra.mxu0 0.0
        %872 = vmatprep.subr.mxu0 0.0
        %873 = vmatpush1.xpose.msra.mxu0 0.0
        %874 = vmatprep.subr.mxu0 0.0
        %875 = vmatpush1.xpose.msra.mxu0 0.0
        %876 = vmatprep.subr.mxu0 0.0
        %877 = vmatpush1.xpose.msra.mxu0 0.0
        %878 = vmatprep.subr.mxu0 0.0
        %879 = vmatpush1.xpose.msra.mxu0 0.0
        %880 = vmatprep.subr.mxu0 0.0
        %881 = vmatpush1.xpose.msra.mxu0 0.0
        %882 = vmatprep.subr.mxu0 0.0
        %883 = vmatpush1.xpose.msra.mxu0 0.0
        %884 = vmatprep.subr.mxu0 0.0
        %885 = vmatpush1.xpose.msra.mxu0 0.0
        %886 = vmatprep.subr.mxu0 0.0
        %887 = vmatpush1.xpose.msra.mxu0 0.0
        %888 = vmatprep.subr.mxu0 0.0
        %889 = vmatpush1.xpose.msra.mxu0 0.0
        %890 = vmatprep.subr.mxu0 0.0
        %891 = vmatpush1.xpose.msra.mxu0 0.0
        %892 = vmatprep.mubr.f32.mxu0 0.0
        %893 = vmatmul.mubr.f32.gmra.mrb[0].mxu0 %v817
        %v894 = vpop.f32.mrb[0].mxu0
        %v895 = vadd.f32 %v827, %v894
        %v896 = vpop.f32.mrb[0].mxu0
        %897 = vdwg.mxu0
        %898 = vst [vmem:[%s326] sm:$0x1] %v895
        %s899 = sand.u32 %s187, 1
        %s900 = scalar_lea.sflag [#allocation5], %s899
        %s901 = sand.u32 %s187, 1
        %s902 = scalar_lea.vmem [#allocation9], %s901
        // Predicated region
        $region61: #{tpu_custom_call.1} parent=47 // pred_check
          %p903 = pneg %p197
        $region62: #{tpu_custom_call.1} parent=47 // pred_check_branch
          %905 = sbr.rel (%p903) target = $region64
        $region63: #{tpu_custom_call.1} parent=47 // pred_region
          %s907 = ssub.s32 16, 16
          %908 = vsyncadd %s900, %s907
          %s909 = smul.addr %s27, 16
          %s910 = scalar_lea.hbm %s7, %s909
          %s912 = sshll.u32 %s902, 4
          %s913 = int_to_ptr.vmem [resolvable:$true] %s912
          %915 = dma.vmem_to_hbm [thread:$0]  %s913, 16, %s910, %s900
        $region64: #{tpu_custom_call.1} parent=47 // pred_fallthru
          _
      $region48: #{tpu_custom_call.1} parent=5 // pred_fallthru
        _
      %p916 = scmp.le.s32.totalorder 2, %s22
      // Predicated region
      $region65: #{tpu_custom_call.1} parent=5 // pred_check
        %p917 = pneg %p916
      $region66: #{tpu_custom_call.1} parent=5 // pred_check_branch
        %919 = sbr.rel (%p917) target = $region68
      $region67: #{tpu_custom_call.1} parent=5 // pred_region
        %s920 = ssub.s32 %s22, 2
        // Predicated region
        $region69: #{tpu_custom_call.1} parent=67 // pred_check
          %p921 = pneg %p203
        $region70: #{tpu_custom_call.1} parent=67 // pred_check_branch
          %923 = sbr.rel (%p921) target = $region72
        $region71: #{tpu_custom_call.1} parent=67 // pred_region
          %s924 = sand.u32 %s188, 1
          %s925 = scalar_lea.sflag [#allocation5], %s924
          %s926 = sand.u32 %s188, 1
          %s927 = scalar_lea.vmem [#allocation9], %s926
          %928 = dma.done %s925, 16
        $region72: #{tpu_custom_call.1} parent=67 // pred_fallthru
          _
      $region68: #{tpu_custom_call.1} parent=5 // pred_fallthru
        _
    $region6: #{tpu_custom_call.1} parent=1 // loop_footer
      %s26 = sadd.s32 1, %s22
    $region7: #{tpu_custom_call.1} parent=1 // loop_footer_branch
      %21 = sbr.rel target = $region3
    $region8: #{tpu_custom_call.1} parent=1 // loop_exit
      _
    %929 = vsyncpa [#allocation4], 1
    %s930 = scalar_lea.sflag [#allocation4], 1
    %931 = vsyncpa %s930, 1
    %932 = vsyncpa [#allocation7], 1
    %933 = vsyncpa [#allocation5], 1
    %s934 = scalar_lea.sflag [#allocation5], 1
    %935 = vsyncpa %s934, 1

</llo_original>
